<compile_context>
chip_gen: v7x
topology: tpu7x:2x2x1
jax: 0.10.0
libtpu: 0.0.40
codegen_flags: <defaults>
</compile_context>

<pallas_src>
import jax
import jax.numpy as jnp
from jax import lax
from jax.experimental import pallas as pl
from jax.experimental.pallas import tpu as pltpu
import numpy as np

# --- "config" values (synthetic, deterministic) -------------------------------
VOCAB = 16          # len(config.numSequence)
PAD = 0             # config.numSequence.PAD
EMB_DIM = 32        # config.embedding_dim
HIDDEN = 32         # config.hidden_size
NUM_LAYERS = 1      # config.num_layers (assumed 1)


def _encoder_kernel(tok_ref, len_ref, tbl_ref, wh_ref, bhn_ref, out_ref, hfin_ref):
    """Fused embedding + GRU recurrence.

    tok_ref : (S*Bp, 1) int32   time-major flattened tokens (row = t*Bp + b), batch padded to Bp
    len_ref : (Bp, 1)   int32   sequence lengths (0 for padded batch rows)
    tbl_ref : (V, 3H)   f32     emb @ [Wir|Wiz|Win] + folded biases
    wh_ref  : (H, 3H)   f32     [Whr|Whz|Whn]
    bhn_ref : (1, H)    f32     b_hn (stays inside r * (h@Whn + b_hn))
    out_ref : (Bp, S*H) f32     lane-dense padded GRU outputs (step t in cols t*H:(t+1)*H)
    hfin_ref: (Bp, H)   f32     final hidden state
    """
    Bp, H = hfin_ref.shape
    SBp = tok_ref.shape[0]
    S = SBp // Bp
    V = tbl_ref.shape[0]

    tbl = tbl_ref[...]
    wh = wh_ref[...]
    # Hoisted broadcasts (JAX does not CSE broadcast_in_dim inside loops).
    bhn_b = jnp.broadcast_to(bhn_ref[...], (Bp, H))
    lens_b = jnp.broadcast_to(len_ref[...], (Bp, H))

    # ---- hoisted: embedding lookup + input-gate projections for ALL steps ----
    # one-hot (S*Bp, V) @ fused table (V, 3H) -> input contribution per step.
    vocab_iota = lax.broadcasted_iota(jnp.int32, (SBp, V), 1)
    onehot = (tok_ref[...] == vocab_iota).astype(jnp.float32)            # (S*Bp, V)
    xproj = jnp.dot(onehot, tbl, preferred_element_type=jnp.float32)     # (S*Bp, 3H)

    h = jnp.zeros((Bp, H), jnp.float32)
    outs = []
    # Fully unrolled recurrence (S is small & static); one MXU matmul, one
    # fused sigmoid + one tanh (EUP) and a few VPU ops per step.
    for t in range(S):
        x_t = xproj[t * Bp:(t + 1) * Bp, :]                              # sublane-aligned (Bp=8)
        hm = jnp.dot(h, wh, preferred_element_type=jnp.float32)          # (Bp, 3H)

        rz = jax.nn.sigmoid(x_t[:, :2 * H] + hm[:, :2 * H])              # fused r/z prefix block
        r = rz[:, :H]
        z = rz[:, H:]
        n = jnp.tanh(x_t[:, 2 * H:] + r * (hm[:, 2 * H:] + bhn_b))
        h_new = (1.0 - z) * n + z * h

        valid = t < lens_b                                               # (Bp, H) bool
        outs.append(jnp.where(valid, h_new, 0.0))                        # zeros past length
        h = jnp.where(valid, h_new, h)                                   # freeze past length

    # Single lane-dense store: (Bp, S*H) with S*H a multiple of 128.
    out_ref[...] = jnp.concatenate(outs, axis=1).astype(out_ref.dtype)
    hfin_ref[...] = h.astype(hfin_ref.dtype)


def pack_params(params):
    """Parameter-only fusion, done ONCE (not per forward call)."""
    w_i = jnp.concatenate([params["W_ir"], params["W_iz"], params["W_in"]], axis=1)  # (E, 3H)
    w_h = jnp.concatenate([params["W_hr"], params["W_hz"], params["W_hn"]], axis=1)  # (H, 3H)
    b_fused = jnp.concatenate([params["b_ir"] + params["b_hr"],
                               params["b_iz"] + params["b_hz"],
                               params["b_in"]], axis=1)                              # (1, 3H)
    tbl = params["emb"] @ w_i + b_fused                                              # (V, 3H)
    return {"tbl": tbl, "w_h": w_h, "b_hn": params["b_hn"]}


@jax.jit
def encoder_forward(tokens, lengths, packed):
    """tokens: [B, S] int32, lengths: [B] int32 -> (outputs [B,S,H], h_n [1,B,H])"""
    B, S = tokens.shape
    H = HIDDEN
    Bp = max(8, ((B + 7) // 8) * 8)   # pad batch to a full sublane tile

    # pad batch rows (PAD tokens, length 0 -> state stays zero) and flatten
    # time-major so step t occupies contiguous, 8-sublane-aligned rows.
    tok_p = jnp.full((Bp, S), PAD, jnp.int32).at[:B].set(tokens.astype(jnp.int32))
    len_p = jnp.zeros((Bp,), jnp.int32).at[:B].set(lengths.astype(jnp.int32))
    tok_col = tok_p.T.reshape(S * Bp, 1)
    len_col = len_p.reshape(Bp, 1)

    vmem = pl.BlockSpec(memory_space=pltpu.MemorySpace.VMEM)
    out_flat, h_final = pl.pallas_call(
        _encoder_kernel,
        out_shape=(jax.ShapeDtypeStruct((Bp, S * H), jnp.float32),
                   jax.ShapeDtypeStruct((Bp, H), jnp.float32)),
        in_specs=[vmem] * 5,
        out_specs=(vmem, vmem),
    )(tok_col, len_col, packed["tbl"], packed["w_h"], packed["b_hn"])

    outputs = out_flat[:B].reshape(B, S, H)       # (B, S, H), batch_first=True
    return outputs, h_final[:B][None]             # h_n: [num_layers=1, B, H]


def init_params(key):
    """Deterministic parameter init matching PyTorch module shapes."""
    kemb, kih, khh, kbih, kbhh = jax.random.split(key, 5)
    emb = jax.random.normal(kemb, (VOCAB, EMB_DIM), jnp.float32)
    emb = emb.at[PAD].set(0.0)                       # padding_idx row = 0

    bound = 1.0 / np.sqrt(HIDDEN)
    w_ih = jax.random.uniform(kih, (3 * HIDDEN, EMB_DIM), jnp.float32, -bound, bound)
    w_hh = jax.random.uniform(khh, (3 * HIDDEN, HIDDEN), jnp.float32, -bound, bound)
    b_ih = jax.random.uniform(kbih, (3 * HIDDEN,), jnp.float32, -bound, bound)
    b_hh = jax.random.uniform(kbhh, (3 * HIDDEN,), jnp.float32, -bound, bound)

    H = HIDDEN
    p = {"emb": emb}
    # split the packed PyTorch weights into per-gate matrices, pre-transposed
    # so the kernel does x @ W_i*^T  (stored as [E, H] / [H, H])
    for name, i in (("r", 0), ("z", 1), ("n", 2)):
        p[f"W_i{name}"] = w_ih[i * H:(i + 1) * H].T          # (E, H)
        p[f"W_h{name}"] = w_hh[i * H:(i + 1) * H].T          # (H, H)
        p[f"b_i{name}"] = b_ih[i * H:(i + 1) * H][None, :]   # (1, H)
        p[f"b_h{name}"] = b_hh[i * H:(i + 1) * H][None, :]   # (1, H)
    return p


def reference_forward(tokens, lengths, p):
    """Pure-JAX reference (un-fused GRU math) for a correctness check."""
    B, S = tokens.shape
    x_emb = p["emb"][tokens]                                  # (B, S, E)

    def step(h, t):
        x = x_emb[:, t, :]
        r = jax.nn.sigmoid(x @ p["W_ir"] + p["b_ir"] + h @ p["W_hr"] + p["b_hr"])
        z = jax.nn.sigmoid(x @ p["W_iz"] + p["b_iz"] + h @ p["W_hz"] + p["b_hz"])
        n = jnp.tanh(x @ p["W_in"] + p["b_in"] + r * (h @ p["W_hn"] + p["b_hn"]))
        h_new = (1.0 - z) * n + z * h
        valid = (t < lengths)[:, None]
        h_next = jnp.where(valid, h_new, h)
        return h_next, jnp.where(valid, h_new, 0.0)

    h_final, outs = lax.scan(step, jnp.zeros((B, HIDDEN), jnp.float32), jnp.arange(S))
    return jnp.transpose(outs, (1, 0, 2)), h_final[None]


if __name__ == "__main__":
    key = jax.random.PRNGKey(0)
    kparam, ktok = jax.random.split(key)
    params = init_params(kparam)
    packed = pack_params(params)          # parameter-only fusion, done once

    B, S = 2, 8
    tokens = jax.random.randint(ktok, (B, S), 1, VOCAB, dtype=jnp.int32)
    lengths = jnp.array([8, 5], dtype=jnp.int32)
    # zero-pad past the declared lengths (padding_idx = PAD)
    pos = jnp.arange(S)[None, :]
    tokens = jnp.where(pos < lengths[:, None], tokens, PAD)

    outputs, h_n = encoder_forward(tokens, lengths, packed)
    jax.block_until_ready((outputs, h_n))

    ref_out, ref_h = reference_forward(tokens, lengths, params)
    np.testing.assert_allclose(np.asarray(outputs), np.asarray(ref_out), rtol=1e-5, atol=1e-5)
    np.testing.assert_allclose(np.asarray(h_n), np.asarray(ref_h), rtol=1e-5, atol=1e-5)

    print("KERNEL_OK")
</pallas_src>

<mosaic_0001>
module attributes {stable_mosaic.version = 11 : i64} {
  func.func @_encoder_kernel(%arg0: memref<64x1xi32, #tpu.memory_space<vmem>>, %arg1: memref<8x1xi32, #tpu.memory_space<vmem>>, %arg2: memref<16x96xf32, #tpu.memory_space<vmem>>, %arg3: memref<32x96xf32, #tpu.memory_space<vmem>>, %arg4: memref<1x32xf32, #tpu.memory_space<vmem>>, %arg5: memref<8x256xf32, #tpu.memory_space<vmem>>, %arg6: memref<8x32xf32, #tpu.memory_space<vmem>>) attributes {dimension_semantics = [], scalar_prefetch = 0 : i64, scratch_operands = 0 : i64, tpu.core_type = #tpu.core_type<tc>} {
    %c0 = arith.constant 0 : index
    %c0_0 = arith.constant 0 : index
    %0 = vector.load %arg2[%c0, %c0_0] : memref<16x96xf32, #tpu.memory_space<vmem>>, vector<16x96xf32>
    %c0_1 = arith.constant 0 : index
    %c0_2 = arith.constant 0 : index
    %1 = vector.load %arg3[%c0_1, %c0_2] : memref<32x96xf32, #tpu.memory_space<vmem>>, vector<32x96xf32>
    %c0_3 = arith.constant 0 : index
    %c0_4 = arith.constant 0 : index
    %2 = vector.load %arg4[%c0_3, %c0_4] : memref<1x32xf32, #tpu.memory_space<vmem>>, vector<1x32xf32>
    %3 = vector.shape_cast %2 : vector<1x32xf32> to vector<1x32xf32>
    %4 = vector.broadcast %3 : vector<1x32xf32> to vector<8x32xf32>
    %c0_5 = arith.constant 0 : index
    %c0_6 = arith.constant 0 : index
    %5 = vector.load %arg1[%c0_5, %c0_6] : memref<8x1xi32, #tpu.memory_space<vmem>>, vector<8x1xi32>
    %6 = vector.shape_cast %5 : vector<8x1xi32> to vector<8x1xi32>
    %7 = vector.broadcast %6 : vector<8x1xi32> to vector<8x32xi32>
    %8 = tpu.iota {dimensions = array<i32: 1>} : vector<64x16xi32>
    %c0_7 = arith.constant 0 : index
    %c0_8 = arith.constant 0 : index
    %9 = vector.load %arg0[%c0_7, %c0_8] : memref<64x1xi32, #tpu.memory_space<vmem>>, vector<64x1xi32>
    %10 = vector.broadcast %9 : vector<64x1xi32> to vector<64x16xi32>
    %11 = arith.cmpi eq, %10, %8 : vector<64x16xi32>
    %12 = arith.extui %11 : vector<64x16xi1> to vector<64x16xi32>
    %13 = arith.sitofp %12 : vector<64x16xi32> to vector<64x16xf32>
    %cst = arith.constant dense<0.000000e+00> : vector<64x96xf32>
    %14 = tpu.matmul %13, %0, %cst {dimension_numbers = #tpu.dot_dimension_numbers<[1], [0], [0], [1], [0, 0, 1, 1], [], []>} : vector<64x16xf32>, vector<16x96xf32>, vector<64x96xf32> -> vector<64x96xf32>
    %cst_9 = arith.constant 0.000000e+00 : f32
    %15 = vector.broadcast %cst_9 : f32 to vector<8x32xf32>
    %16 = vector.extract_strided_slice %14 {offsets = [0, 0], sizes = [8, 96], strides = [1, 1]} : vector<64x96xf32> to vector<8x96xf32>
    %cst_10 = arith.constant dense<0.000000e+00> : vector<8x96xf32>
    %17 = tpu.matmul %15, %1, %cst_10 {dimension_numbers = #tpu.dot_dimension_numbers<[1], [0], [0], [1], [0, 0, 1, 1], [], []>} : vector<8x32xf32>, vector<32x96xf32>, vector<8x96xf32> -> vector<8x96xf32>
    %18 = vector.extract_strided_slice %16 {offsets = [0, 0], sizes = [8, 64], strides = [1, 1]} : vector<8x96xf32> to vector<8x64xf32>
    %19 = vector.extract_strided_slice %17 {offsets = [0, 0], sizes = [8, 64], strides = [1, 1]} : vector<8x96xf32> to vector<8x64xf32>
    %20 = arith.addf %18, %19 : vector<8x64xf32>
    %21 = arith.negf %20 : vector<8x64xf32>
    %22 = math.exp %21 : vector<8x64xf32>
    %cst_11 = arith.constant 1.000000e+00 : f32
    %23 = vector.broadcast %cst_11 : f32 to vector<8x64xf32>
    %24 = arith.addf %23, %22 : vector<8x64xf32>
    %25 = arith.divf %23, %24 : vector<8x64xf32>
    %26 = vector.extract_strided_slice %25 {offsets = [0, 0], sizes = [8, 32], strides = [1, 1]} : vector<8x64xf32> to vector<8x32xf32>
    %27 = vector.extract_strided_slice %25 {offsets = [0, 32], sizes = [8, 32], strides = [1, 1]} : vector<8x64xf32> to vector<8x32xf32>
    %28 = vector.extract_strided_slice %16 {offsets = [0, 64], sizes = [8, 32], strides = [1, 1]} : vector<8x96xf32> to vector<8x32xf32>
    %29 = vector.extract_strided_slice %17 {offsets = [0, 64], sizes = [8, 32], strides = [1, 1]} : vector<8x96xf32> to vector<8x32xf32>
    %30 = arith.addf %29, %4 : vector<8x32xf32>
    %31 = arith.mulf %26, %30 : vector<8x32xf32>
    %32 = arith.addf %28, %31 : vector<8x32xf32>
    %33 = math.tanh %32 : vector<8x32xf32>
    %cst_12 = arith.constant 1.000000e+00 : f32
    %34 = vector.broadcast %cst_12 : f32 to vector<8x32xf32>
    %35 = arith.subf %34, %27 : vector<8x32xf32>
    %36 = arith.mulf %35, %33 : vector<8x32xf32>
    %37 = arith.mulf %27, %15 : vector<8x32xf32>
    %38 = arith.addf %36, %37 : vector<8x32xf32>
    %c0_i32 = arith.constant 0 : i32
    %39 = vector.broadcast %c0_i32 : i32 to vector<8x32xi32>
    %40 = arith.cmpi sgt, %7, %39 : vector<8x32xi32>
    %cst_13 = arith.constant 0.000000e+00 : f32
    %41 = vector.broadcast %cst_13 : f32 to vector<8x32xf32>
    %42 = arith.select %40, %38, %41 : vector<8x32xi1>, vector<8x32xf32>
    %43 = arith.select %40, %38, %15 : vector<8x32xi1>, vector<8x32xf32>
    %44 = vector.extract_strided_slice %14 {offsets = [8, 0], sizes = [8, 96], strides = [1, 1]} : vector<64x96xf32> to vector<8x96xf32>
    %cst_14 = arith.constant dense<0.000000e+00> : vector<8x96xf32>
    %45 = tpu.matmul %43, %1, %cst_14 {dimension_numbers = #tpu.dot_dimension_numbers<[1], [0], [0], [1], [0, 0, 1, 1], [], []>} : vector<8x32xf32>, vector<32x96xf32>, vector<8x96xf32> -> vector<8x96xf32>
    %46 = vector.extract_strided_slice %44 {offsets = [0, 0], sizes = [8, 64], strides = [1, 1]} : vector<8x96xf32> to vector<8x64xf32>
    %47 = vector.extract_strided_slice %45 {offsets = [0, 0], sizes = [8, 64], strides = [1, 1]} : vector<8x96xf32> to vector<8x64xf32>
    %48 = arith.addf %46, %47 : vector<8x64xf32>
    %49 = arith.negf %48 : vector<8x64xf32>
    %50 = math.exp %49 : vector<8x64xf32>
    %cst_15 = arith.constant 1.000000e+00 : f32
    %51 = vector.broadcast %cst_15 : f32 to vector<8x64xf32>
    %52 = arith.addf %51, %50 : vector<8x64xf32>
    %53 = arith.divf %51, %52 : vector<8x64xf32>
    %54 = vector.extract_strided_slice %53 {offsets = [0, 0], sizes = [8, 32], strides = [1, 1]} : vector<8x64xf32> to vector<8x32xf32>
    %55 = vector.extract_strided_slice %53 {offsets = [0, 32], sizes = [8, 32], strides = [1, 1]} : vector<8x64xf32> to vector<8x32xf32>
    %56 = vector.extract_strided_slice %44 {offsets = [0, 64], sizes = [8, 32], strides = [1, 1]} : vector<8x96xf32> to vector<8x32xf32>
    %57 = vector.extract_strided_slice %45 {offsets = [0, 64], sizes = [8, 32], strides = [1, 1]} : vector<8x96xf32> to vector<8x32xf32>
    %58 = arith.addf %57, %4 : vector<8x32xf32>
    %59 = arith.mulf %54, %58 : vector<8x32xf32>
    %60 = arith.addf %56, %59 : vector<8x32xf32>
    %61 = math.tanh %60 : vector<8x32xf32>
    %cst_16 = arith.constant 1.000000e+00 : f32
    %62 = vector.broadcast %cst_16 : f32 to vector<8x32xf32>
    %63 = arith.subf %62, %55 : vector<8x32xf32>
    %64 = arith.mulf %63, %61 : vector<8x32xf32>
    %65 = arith.mulf %55, %43 : vector<8x32xf32>
    %66 = arith.addf %64, %65 : vector<8x32xf32>
    %c1_i32 = arith.constant 1 : i32
    %67 = vector.broadcast %c1_i32 : i32 to vector<8x32xi32>
    %68 = arith.cmpi sgt, %7, %67 : vector<8x32xi32>
    %cst_17 = arith.constant 0.000000e+00 : f32
    %69 = vector.broadcast %cst_17 : f32 to vector<8x32xf32>
    %70 = arith.select %68, %66, %69 : vector<8x32xi1>, vector<8x32xf32>
    %71 = arith.select %68, %66, %43 : vector<8x32xi1>, vector<8x32xf32>
    %72 = vector.extract_strided_slice %14 {offsets = [16, 0], sizes = [8, 96], strides = [1, 1]} : vector<64x96xf32> to vector<8x96xf32>
    %cst_18 = arith.constant dense<0.000000e+00> : vector<8x96xf32>
    %73 = tpu.matmul %71, %1, %cst_18 {dimension_numbers = #tpu.dot_dimension_numbers<[1], [0], [0], [1], [0, 0, 1, 1], [], []>} : vector<8x32xf32>, vector<32x96xf32>, vector<8x96xf32> -> vector<8x96xf32>
    %74 = vector.extract_strided_slice %72 {offsets = [0, 0], sizes = [8, 64], strides = [1, 1]} : vector<8x96xf32> to vector<8x64xf32>
    %75 = vector.extract_strided_slice %73 {offsets = [0, 0], sizes = [8, 64], strides = [1, 1]} : vector<8x96xf32> to vector<8x64xf32>
    %76 = arith.addf %74, %75 : vector<8x64xf32>
    %77 = arith.negf %76 : vector<8x64xf32>
    %78 = math.exp %77 : vector<8x64xf32>
    %cst_19 = arith.constant 1.000000e+00 : f32
    %79 = vector.broadcast %cst_19 : f32 to vector<8x64xf32>
    %80 = arith.addf %79, %78 : vector<8x64xf32>
    %81 = arith.divf %79, %80 : vector<8x64xf32>
    %82 = vector.extract_strided_slice %81 {offsets = [0, 0], sizes = [8, 32], strides = [1, 1]} : vector<8x64xf32> to vector<8x32xf32>
    %83 = vector.extract_strided_slice %81 {offsets = [0, 32], sizes = [8, 32], strides = [1, 1]} : vector<8x64xf32> to vector<8x32xf32>
    %84 = vector.extract_strided_slice %72 {offsets = [0, 64], sizes = [8, 32], strides = [1, 1]} : vector<8x96xf32> to vector<8x32xf32>
    %85 = vector.extract_strided_slice %73 {offsets = [0, 64], sizes = [8, 32], strides = [1, 1]} : vector<8x96xf32> to vector<8x32xf32>
    %86 = arith.addf %85, %4 : vector<8x32xf32>
    %87 = arith.mulf %82, %86 : vector<8x32xf32>
    %88 = arith.addf %84, %87 : vector<8x32xf32>
    %89 = math.tanh %88 : vector<8x32xf32>
    %cst_20 = arith.constant 1.000000e+00 : f32
    %90 = vector.broadcast %cst_20 : f32 to vector<8x32xf32>
    %91 = arith.subf %90, %83 : vector<8x32xf32>
    %92 = arith.mulf %91, %89 : vector<8x32xf32>
    %93 = arith.mulf %83, %71 : vector<8x32xf32>
    %94 = arith.addf %92, %93 : vector<8x32xf32>
    %c2_i32 = arith.constant 2 : i32
    %95 = vector.broadcast %c2_i32 : i32 to vector<8x32xi32>
    %96 = arith.cmpi sgt, %7, %95 : vector<8x32xi32>
    %cst_21 = arith.constant 0.000000e+00 : f32
    %97 = vector.broadcast %cst_21 : f32 to vector<8x32xf32>
    %98 = arith.select %96, %94, %97 : vector<8x32xi1>, vector<8x32xf32>
    %99 = arith.select %96, %94, %71 : vector<8x32xi1>, vector<8x32xf32>
    %100 = vector.extract_strided_slice %14 {offsets = [24, 0], sizes = [8, 96], strides = [1, 1]} : vector<64x96xf32> to vector<8x96xf32>
    %cst_22 = arith.constant dense<0.000000e+00> : vector<8x96xf32>
    %101 = tpu.matmul %99, %1, %cst_22 {dimension_numbers = #tpu.dot_dimension_numbers<[1], [0], [0], [1], [0, 0, 1, 1], [], []>} : vector<8x32xf32>, vector<32x96xf32>, vector<8x96xf32> -> vector<8x96xf32>
    %102 = vector.extract_strided_slice %100 {offsets = [0, 0], sizes = [8, 64], strides = [1, 1]} : vector<8x96xf32> to vector<8x64xf32>
    %103 = vector.extract_strided_slice %101 {offsets = [0, 0], sizes = [8, 64], strides = [1, 1]} : vector<8x96xf32> to vector<8x64xf32>
    %104 = arith.addf %102, %103 : vector<8x64xf32>
    %105 = arith.negf %104 : vector<8x64xf32>
    %106 = math.exp %105 : vector<8x64xf32>
    %cst_23 = arith.constant 1.000000e+00 : f32
    %107 = vector.broadcast %cst_23 : f32 to vector<8x64xf32>
    %108 = arith.addf %107, %106 : vector<8x64xf32>
    %109 = arith.divf %107, %108 : vector<8x64xf32>
    %110 = vector.extract_strided_slice %109 {offsets = [0, 0], sizes = [8, 32], strides = [1, 1]} : vector<8x64xf32> to vector<8x32xf32>
    %111 = vector.extract_strided_slice %109 {offsets = [0, 32], sizes = [8, 32], strides = [1, 1]} : vector<8x64xf32> to vector<8x32xf32>
    %112 = vector.extract_strided_slice %100 {offsets = [0, 64], sizes = [8, 32], strides = [1, 1]} : vector<8x96xf32> to vector<8x32xf32>
    %113 = vector.extract_strided_slice %101 {offsets = [0, 64], sizes = [8, 32], strides = [1, 1]} : vector<8x96xf32> to vector<8x32xf32>
    %114 = arith.addf %113, %4 : vector<8x32xf32>
    %115 = arith.mulf %110, %114 : vector<8x32xf32>
    %116 = arith.addf %112, %115 : vector<8x32xf32>
    %117 = math.tanh %116 : vector<8x32xf32>
    %cst_24 = arith.constant 1.000000e+00 : f32
    %118 = vector.broadcast %cst_24 : f32 to vector<8x32xf32>
    %119 = arith.subf %118, %111 : vector<8x32xf32>
    %120 = arith.mulf %119, %117 : vector<8x32xf32>
    %121 = arith.mulf %111, %99 : vector<8x32xf32>
    %122 = arith.addf %120, %121 : vector<8x32xf32>
    %c3_i32 = arith.constant 3 : i32
    %123 = vector.broadcast %c3_i32 : i32 to vector<8x32xi32>
    %124 = arith.cmpi sgt, %7, %123 : vector<8x32xi32>
    %cst_25 = arith.constant 0.000000e+00 : f32
    %125 = vector.broadcast %cst_25 : f32 to vector<8x32xf32>
    %126 = arith.select %124, %122, %125 : vector<8x32xi1>, vector<8x32xf32>
    %127 = arith.select %124, %122, %99 : vector<8x32xi1>, vector<8x32xf32>
    %128 = vector.extract_strided_slice %14 {offsets = [32, 0], sizes = [8, 96], strides = [1, 1]} : vector<64x96xf32> to vector<8x96xf32>
    %cst_26 = arith.constant dense<0.000000e+00> : vector<8x96xf32>
    %129 = tpu.matmul %127, %1, %cst_26 {dimension_numbers = #tpu.dot_dimension_numbers<[1], [0], [0], [1], [0, 0, 1, 1], [], []>} : vector<8x32xf32>, vector<32x96xf32>, vector<8x96xf32> -> vector<8x96xf32>
    %130 = vector.extract_strided_slice %128 {offsets = [0, 0], sizes = [8, 64], strides = [1, 1]} : vector<8x96xf32> to vector<8x64xf32>
    %131 = vector.extract_strided_slice %129 {offsets = [0, 0], sizes = [8, 64], strides = [1, 1]} : vector<8x96xf32> to vector<8x64xf32>
    %132 = arith.addf %130, %131 : vector<8x64xf32>
    %133 = arith.negf %132 : vector<8x64xf32>
    %134 = math.exp %133 : vector<8x64xf32>
    %cst_27 = arith.constant 1.000000e+00 : f32
    %135 = vector.broadcast %cst_27 : f32 to vector<8x64xf32>
    %136 = arith.addf %135, %134 : vector<8x64xf32>
    %137 = arith.divf %135, %136 : vector<8x64xf32>
    %138 = vector.extract_strided_slice %137 {offsets = [0, 0], sizes = [8, 32], strides = [1, 1]} : vector<8x64xf32> to vector<8x32xf32>
    %139 = vector.extract_strided_slice %137 {offsets = [0, 32], sizes = [8, 32], strides = [1, 1]} : vector<8x64xf32> to vector<8x32xf32>
    %140 = vector.extract_strided_slice %128 {offsets = [0, 64], sizes = [8, 32], strides = [1, 1]} : vector<8x96xf32> to vector<8x32xf32>
    %141 = vector.extract_strided_slice %129 {offsets = [0, 64], sizes = [8, 32], strides = [1, 1]} : vector<8x96xf32> to vector<8x32xf32>
    %142 = arith.addf %141, %4 : vector<8x32xf32>
    %143 = arith.mulf %138, %142 : vector<8x32xf32>
    %144 = arith.addf %140, %143 : vector<8x32xf32>
    %145 = math.tanh %144 : vector<8x32xf32>
    %cst_28 = arith.constant 1.000000e+00 : f32
    %146 = vector.broadcast %cst_28 : f32 to vector<8x32xf32>
    %147 = arith.subf %146, %139 : vector<8x32xf32>
    %148 = arith.mulf %147, %145 : vector<8x32xf32>
    %149 = arith.mulf %139, %127 : vector<8x32xf32>
    %150 = arith.addf %148, %149 : vector<8x32xf32>
    %c4_i32 = arith.constant 4 : i32
    %151 = vector.broadcast %c4_i32 : i32 to vector<8x32xi32>
    %152 = arith.cmpi sgt, %7, %151 : vector<8x32xi32>
    %cst_29 = arith.constant 0.000000e+00 : f32
    %153 = vector.broadcast %cst_29 : f32 to vector<8x32xf32>
    %154 = arith.select %152, %150, %153 : vector<8x32xi1>, vector<8x32xf32>
    %155 = arith.select %152, %150, %127 : vector<8x32xi1>, vector<8x32xf32>
    %156 = vector.extract_strided_slice %14 {offsets = [40, 0], sizes = [8, 96], strides = [1, 1]} : vector<64x96xf32> to vector<8x96xf32>
    %cst_30 = arith.constant dense<0.000000e+00> : vector<8x96xf32>
    %157 = tpu.matmul %155, %1, %cst_30 {dimension_numbers = #tpu.dot_dimension_numbers<[1], [0], [0], [1], [0, 0, 1, 1], [], []>} : vector<8x32xf32>, vector<32x96xf32>, vector<8x96xf32> -> vector<8x96xf32>
    %158 = vector.extract_strided_slice %156 {offsets = [0, 0], sizes = [8, 64], strides = [1, 1]} : vector<8x96xf32> to vector<8x64xf32>
    %159 = vector.extract_strided_slice %157 {offsets = [0, 0], sizes = [8, 64], strides = [1, 1]} : vector<8x96xf32> to vector<8x64xf32>
    %160 = arith.addf %158, %159 : vector<8x64xf32>
    %161 = arith.negf %160 : vector<8x64xf32>
    %162 = math.exp %161 : vector<8x64xf32>
    %cst_31 = arith.constant 1.000000e+00 : f32
    %163 = vector.broadcast %cst_31 : f32 to vector<8x64xf32>
    %164 = arith.addf %163, %162 : vector<8x64xf32>
    %165 = arith.divf %163, %164 : vector<8x64xf32>
    %166 = vector.extract_strided_slice %165 {offsets = [0, 0], sizes = [8, 32], strides = [1, 1]} : vector<8x64xf32> to vector<8x32xf32>
    %167 = vector.extract_strided_slice %165 {offsets = [0, 32], sizes = [8, 32], strides = [1, 1]} : vector<8x64xf32> to vector<8x32xf32>
    %168 = vector.extract_strided_slice %156 {offsets = [0, 64], sizes = [8, 32], strides = [1, 1]} : vector<8x96xf32> to vector<8x32xf32>
    %169 = vector.extract_strided_slice %157 {offsets = [0, 64], sizes = [8, 32], strides = [1, 1]} : vector<8x96xf32> to vector<8x32xf32>
    %170 = arith.addf %169, %4 : vector<8x32xf32>
    %171 = arith.mulf %166, %170 : vector<8x32xf32>
    %172 = arith.addf %168, %171 : vector<8x32xf32>
    %173 = math.tanh %172 : vector<8x32xf32>
    %cst_32 = arith.constant 1.000000e+00 : f32
    %174 = vector.broadcast %cst_32 : f32 to vector<8x32xf32>
    %175 = arith.subf %174, %167 : vector<8x32xf32>
    %176 = arith.mulf %175, %173 : vector<8x32xf32>
    %177 = arith.mulf %167, %155 : vector<8x32xf32>
    %178 = arith.addf %176, %177 : vector<8x32xf32>
    %c5_i32 = arith.constant 5 : i32
    %179 = vector.broadcast %c5_i32 : i32 to vector<8x32xi32>
    %180 = arith.cmpi sgt, %7, %179 : vector<8x32xi32>
    %cst_33 = arith.constant 0.000000e+00 : f32
    %181 = vector.broadcast %cst_33 : f32 to vector<8x32xf32>
    %182 = arith.select %180, %178, %181 : vector<8x32xi1>, vector<8x32xf32>
    %183 = arith.select %180, %178, %155 : vector<8x32xi1>, vector<8x32xf32>
    %184 = vector.extract_strided_slice %14 {offsets = [48, 0], sizes = [8, 96], strides = [1, 1]} : vector<64x96xf32> to vector<8x96xf32>
    %cst_34 = arith.constant dense<0.000000e+00> : vector<8x96xf32>
    %185 = tpu.matmul %183, %1, %cst_34 {dimension_numbers = #tpu.dot_dimension_numbers<[1], [0], [0], [1], [0, 0, 1, 1], [], []>} : vector<8x32xf32>, vector<32x96xf32>, vector<8x96xf32> -> vector<8x96xf32>
    %186 = vector.extract_strided_slice %184 {offsets = [0, 0], sizes = [8, 64], strides = [1, 1]} : vector<8x96xf32> to vector<8x64xf32>
    %187 = vector.extract_strided_slice %185 {offsets = [0, 0], sizes = [8, 64], strides = [1, 1]} : vector<8x96xf32> to vector<8x64xf32>
    %188 = arith.addf %186, %187 : vector<8x64xf32>
    %189 = arith.negf %188 : vector<8x64xf32>
    %190 = math.exp %189 : vector<8x64xf32>
    %cst_35 = arith.constant 1.000000e+00 : f32
    %191 = vector.broadcast %cst_35 : f32 to vector<8x64xf32>
    %192 = arith.addf %191, %190 : vector<8x64xf32>
    %193 = arith.divf %191, %192 : vector<8x64xf32>
    %194 = vector.extract_strided_slice %193 {offsets = [0, 0], sizes = [8, 32], strides = [1, 1]} : vector<8x64xf32> to vector<8x32xf32>
    %195 = vector.extract_strided_slice %193 {offsets = [0, 32], sizes = [8, 32], strides = [1, 1]} : vector<8x64xf32> to vector<8x32xf32>
    %196 = vector.extract_strided_slice %184 {offsets = [0, 64], sizes = [8, 32], strides = [1, 1]} : vector<8x96xf32> to vector<8x32xf32>
    %197 = vector.extract_strided_slice %185 {offsets = [0, 64], sizes = [8, 32], strides = [1, 1]} : vector<8x96xf32> to vector<8x32xf32>
    %198 = arith.addf %197, %4 : vector<8x32xf32>
    %199 = arith.mulf %194, %198 : vector<8x32xf32>
    %200 = arith.addf %196, %199 : vector<8x32xf32>
    %201 = math.tanh %200 : vector<8x32xf32>
    %cst_36 = arith.constant 1.000000e+00 : f32
    %202 = vector.broadcast %cst_36 : f32 to vector<8x32xf32>
    %203 = arith.subf %202, %195 : vector<8x32xf32>
    %204 = arith.mulf %203, %201 : vector<8x32xf32>
    %205 = arith.mulf %195, %183 : vector<8x32xf32>
    %206 = arith.addf %204, %205 : vector<8x32xf32>
    %c6_i32 = arith.constant 6 : i32
    %207 = vector.broadcast %c6_i32 : i32 to vector<8x32xi32>
    %208 = arith.cmpi sgt, %7, %207 : vector<8x32xi32>
    %cst_37 = arith.constant 0.000000e+00 : f32
    %209 = vector.broadcast %cst_37 : f32 to vector<8x32xf32>
    %210 = arith.select %208, %206, %209 : vector<8x32xi1>, vector<8x32xf32>
    %211 = arith.select %208, %206, %183 : vector<8x32xi1>, vector<8x32xf32>
    %212 = vector.extract_strided_slice %14 {offsets = [56, 0], sizes = [8, 96], strides = [1, 1]} : vector<64x96xf32> to vector<8x96xf32>
    %cst_38 = arith.constant dense<0.000000e+00> : vector<8x96xf32>
    %213 = tpu.matmul %211, %1, %cst_38 {dimension_numbers = #tpu.dot_dimension_numbers<[1], [0], [0], [1], [0, 0, 1, 1], [], []>} : vector<8x32xf32>, vector<32x96xf32>, vector<8x96xf32> -> vector<8x96xf32>
    %214 = vector.extract_strided_slice %212 {offsets = [0, 0], sizes = [8, 64], strides = [1, 1]} : vector<8x96xf32> to vector<8x64xf32>
    %215 = vector.extract_strided_slice %213 {offsets = [0, 0], sizes = [8, 64], strides = [1, 1]} : vector<8x96xf32> to vector<8x64xf32>
    %216 = arith.addf %214, %215 : vector<8x64xf32>
    %217 = arith.negf %216 : vector<8x64xf32>
    %218 = math.exp %217 : vector<8x64xf32>
    %cst_39 = arith.constant 1.000000e+00 : f32
    %219 = vector.broadcast %cst_39 : f32 to vector<8x64xf32>
    %220 = arith.addf %219, %218 : vector<8x64xf32>
    %221 = arith.divf %219, %220 : vector<8x64xf32>
    %222 = vector.extract_strided_slice %221 {offsets = [0, 0], sizes = [8, 32], strides = [1, 1]} : vector<8x64xf32> to vector<8x32xf32>
    %223 = vector.extract_strided_slice %221 {offsets = [0, 32], sizes = [8, 32], strides = [1, 1]} : vector<8x64xf32> to vector<8x32xf32>
    %224 = vector.extract_strided_slice %212 {offsets = [0, 64], sizes = [8, 32], strides = [1, 1]} : vector<8x96xf32> to vector<8x32xf32>
    %225 = vector.extract_strided_slice %213 {offsets = [0, 64], sizes = [8, 32], strides = [1, 1]} : vector<8x96xf32> to vector<8x32xf32>
    %226 = arith.addf %225, %4 : vector<8x32xf32>
    %227 = arith.mulf %222, %226 : vector<8x32xf32>
    %228 = arith.addf %224, %227 : vector<8x32xf32>
    %229 = math.tanh %228 : vector<8x32xf32>
    %cst_40 = arith.constant 1.000000e+00 : f32
    %230 = vector.broadcast %cst_40 : f32 to vector<8x32xf32>
    %231 = arith.subf %230, %223 : vector<8x32xf32>
    %232 = arith.mulf %231, %229 : vector<8x32xf32>
    %233 = arith.mulf %223, %211 : vector<8x32xf32>
    %234 = arith.addf %232, %233 : vector<8x32xf32>
    %c7_i32 = arith.constant 7 : i32
    %235 = vector.broadcast %c7_i32 : i32 to vector<8x32xi32>
    %236 = arith.cmpi sgt, %7, %235 : vector<8x32xi32>
    %cst_41 = arith.constant 0.000000e+00 : f32
    %237 = vector.broadcast %cst_41 : f32 to vector<8x32xf32>
    %238 = arith.select %236, %234, %237 : vector<8x32xi1>, vector<8x32xf32>
    %239 = arith.select %236, %234, %211 : vector<8x32xi1>, vector<8x32xf32>
    %240 = tpu.concatenate %42, %70, %98, %126, %154, %182, %210, %238 in 1 : vector<8x32xf32>, vector<8x32xf32>, vector<8x32xf32>, vector<8x32xf32>, vector<8x32xf32>, vector<8x32xf32>, vector<8x32xf32>, vector<8x32xf32> -> vector<8x256xf32>
    %c0_42 = arith.constant 0 : index
    %c0_43 = arith.constant 0 : index
    %241 = vector.load %arg5[%c0_42, %c0_43] : memref<8x256xf32, #tpu.memory_space<vmem>>, vector<8x256xf32>
    tpu.vector_store %arg5[%c0_42, %c0_43], %240 {strides = array<i32>} : memref<8x256xf32, #tpu.memory_space<vmem>>, vector<8x256xf32>,
    %c0_44 = arith.constant 0 : index
    %c0_45 = arith.constant 0 : index
    %242 = vector.load %arg6[%c0_44, %c0_45] : memref<8x32xf32, #tpu.memory_space<vmem>>, vector<8x32xf32>
    tpu.vector_store %arg6[%c0_44, %c0_45], %239 {strides = array<i32>} : memref<8x32xf32, #tpu.memory_space<vmem>>, vector<8x32xf32>,
    return
  }
}

</mosaic_0001>

<llo_original>
// kernel: encoder_forward.1
$region0: #{encoder_forward.1}
  #allocation0 [shape = 'u32[]', space=smem, size = 0x4, offset = 0x4, fixed_abs, tag = 'smem constant byte address 0x4 - core index']
  #allocation1 [shape = 'u32[144,128]{1,0:T(1,128)}', space=vmem, size = 0x12000, scoped, tag = 'internal scratch']
  %s0 = inlined_call_operand.vmem [shape: s32[64,1], index: 0, kind: input, shape index: {}]
  %s1 = inlined_call_operand.vmem [shape: s32[8,1], index: 1, kind: input, shape index: {}]
  %s2 = inlined_call_operand.vmem [shape: f32[16,96], index: 2, kind: input, shape index: {}]
  %s3 = inlined_call_operand.vmem [shape: f32[32,96], index: 3, kind: input, shape index: {}]
  %s4 = inlined_call_operand.vmem [shape: f32[1,32], index: 4, kind: input, shape index: {}]
  %s5 = inlined_call_operand.vmem [shape: f32[8,256], index: 5, kind: output, shape index: {0}]
  %s6 = inlined_call_operand.vmem [shape: f32[8,32], index: 6, kind: output, shape index: {1}]
  %7 = xla_tuple %s5, %s6
  %s8 = sld [smem:[#allocation0]]
  $region38: #{encoder_forward.1} parent=0
    _
  %s10 = ssub.s32 1, %s8
  %s11 = scalar_select 0, %s10, %s8
  // Predicated region
  $region2: #{encoder_forward.1} parent=0 // pred_check
    _
  $region3: #{encoder_forward.1} parent=0 // pred_check_branch
    %13 = sbr.rel (0) target = $region5
  $region4: #{encoder_forward.1} parent=0 // pred_region
    _
  $region5: #{encoder_forward.1} parent=0 // pred_fallthru
    _
  // Predicated region
  $region6: #{encoder_forward.1} parent=0 // pred_check
    _
  $region7: #{encoder_forward.1} parent=0 // pred_check_branch
    %15 = sbr.rel (0) target = $region9
  $region8: #{encoder_forward.1} parent=0 // pred_region
    _
  $region9: #{encoder_forward.1} parent=0 // pred_fallthru
    _
  // Predicated region
  $region10: #{encoder_forward.1} parent=0 // pred_check
    _
  $region11: #{encoder_forward.1} parent=0 // pred_check_branch
    %17 = sbr.rel (0) target = $region13
  $region12: #{encoder_forward.1} parent=0 // pred_region
    _
  $region13: #{encoder_forward.1} parent=0 // pred_fallthru
    _
  // Predicated region
  $region14: #{encoder_forward.1} parent=0 // pred_check
    _
  $region15: #{encoder_forward.1} parent=0 // pred_check_branch
    %19 = sbr.rel (0) target = $region17
  $region16: #{encoder_forward.1} parent=0 // pred_region
    _
  $region17: #{encoder_forward.1} parent=0 // pred_fallthru
    _
  // Predicated region
  $region18: #{encoder_forward.1} parent=0 // pred_check
    _
  $region19: #{encoder_forward.1} parent=0 // pred_check_branch
    %21 = sbr.rel (0) target = $region21
  $region20: #{encoder_forward.1} parent=0 // pred_region
    _
  $region21: #{encoder_forward.1} parent=0 // pred_fallthru
    _
  %v22 = vld [vmem:[%s2] sm:$0xff]
  %v23 = vld [vmem:[%s2 + $0x8] sm:$0xff]
  %v24 = vld [vmem:[%s3] sm:$0xff]
  %v25 = vld [vmem:[%s3 + $0x8] sm:$0xff]
  %v26 = vld [vmem:[%s3 + $0x10] sm:$0xff]
  %v27 = vld [vmem:[%s3 + $0x18] sm:$0xff]
  %v28 = vld [vmem:[%s4] sm:$0x1]
  %v30 = vlaneseq
  %v31 = vshrl.u32 %v30, 7
  %v32 = vsub.s32 0, %v31
  %v33 = vrot.slane %v28, %v32
  %v34 = vld [vmem:[%s1] sm:$0xff]
  %35 = vset.pattern.permute.xlu0 0
  %36 = vperm.xlu0 %35, %v34
  %v37 = vpop.permute.xlu0 %36
  %v38 = vlaneseq
  %v39 = vand.u32 %v38, 127
  %v40 = vld [vmem:[%s0] sm:$0xff]
  %v41 = vld [vmem:[%s0 + $0x8] sm:$0xff]
  %v42 = vld [vmem:[%s0 + $0x10] sm:$0xff]
  %v43 = vld [vmem:[%s0 + $0x18] sm:$0xff]
  %v44 = vld [vmem:[%s0 + $0x20] sm:$0xff]
  %v45 = vld [vmem:[%s0 + $0x28] sm:$0xff]
  %v46 = vld [vmem:[%s0 + $0x30] sm:$0xff]
  %v47 = vld [vmem:[%s0 + $0x38] sm:$0xff]
  %48 = vset.pattern.permute.xlu0 0
  %49 = vperm.xlu0 %48, %v40
  %v50 = vpop.permute.xlu0 %49
  %51 = vset.pattern.permute.xlu0 0
  %52 = vperm.xlu0 %51, %v41
  %v53 = vpop.permute.xlu0 %52
  %54 = vset.pattern.permute.xlu0 0
  %55 = vperm.xlu0 %54, %v42
  %v56 = vpop.permute.xlu0 %55
  %57 = vset.pattern.permute.xlu0 0
  %58 = vperm.xlu0 %57, %v43
  %v59 = vpop.permute.xlu0 %58
  %60 = vset.pattern.permute.xlu0 0
  %61 = vperm.xlu0 %60, %v44
  %v62 = vpop.permute.xlu0 %61
  %63 = vset.pattern.permute.xlu0 0
  %64 = vperm.xlu0 %63, %v45
  %v65 = vpop.permute.xlu0 %64
  %66 = vset.pattern.permute.xlu0 0
  %67 = vperm.xlu0 %66, %v46
  %v68 = vpop.permute.xlu0 %67
  %69 = vset.pattern.permute.xlu0 0
  %70 = vperm.xlu0 %69, %v47
  %v71 = vpop.permute.xlu0 %70
  %vm72 = vcmp.eq.s32.totalorder %v50, %v39
  %vm73 = vcmp.eq.s32.totalorder %v53, %v39
  %vm74 = vcmp.eq.s32.totalorder %v56, %v39
  %vm75 = vcmp.eq.s32.totalorder %v59, %v39
  %vm76 = vcmp.eq.s32.totalorder %v62, %v39
  %vm77 = vcmp.eq.s32.totalorder %v65, %v39
  %vm78 = vcmp.eq.s32.totalorder %v68, %v39
  %vm79 = vcmp.eq.s32.totalorder %v71, %v39
  %v80 = vsel %vm72, 1, 0
  %v81 = vsel %vm73, 1, 0
  %v82 = vsel %vm74, 1, 0
  %v83 = vsel %vm75, 1, 0
  %v84 = vsel %vm76, 1, 0
  %v85 = vsel %vm77, 1, 0
  %v86 = vsel %vm78, 1, 0
  %v87 = vsel %vm79, 1, 0
  %v88 = vcvt.s32.f32 %v80
  %v89 = vcvt.s32.f32 %v81
  %v90 = vcvt.s32.f32 %v82
  %v91 = vcvt.s32.f32 %v83
  %v92 = vcvt.s32.f32 %v84
  %v93 = vcvt.s32.f32 %v85
  %v94 = vcvt.s32.f32 %v86
  %v95 = vcvt.s32.f32 %v87
  %vm96 = vcmask 130048
  %v98 = vsel %vm96, %v88, 0
  %v101 = vsel %vm96, %v89, 0
  %v104 = vsel %vm96, %v90, 0
  %v107 = vsel %vm96, %v91, 0
  %v110 = vsel %vm96, %v92, 0
  %v113 = vsel %vm96, %v93, 0
  %v116 = vsel %vm96, %v94, 0
  %v119 = vsel %vm96, %v95, 0
  %121 = vmatprep.subr.mxu0 0.0
  %122 = vmatpush1.msra.mxu0 %v22
  %123 = vmatprep.subr.mxu0 0.0
  %124 = vmatpush1.msra.mxu0 %v23
  %125 = vmatprep.subr.mxu0 0.0
  %126 = vmatpush1.msra.mxu0 0.0
  %127 = vmatprep.subr.mxu0 0.0
  %128 = vmatpush1.msra.mxu0 0.0
  %129 = vmatprep.subr.mxu0 0.0
  %130 = vmatpush1.msra.mxu0 0.0
  %131 = vmatprep.subr.mxu0 0.0
  %132 = vmatpush1.msra.mxu0 0.0
  %133 = vmatprep.subr.mxu0 0.0
  %134 = vmatpush1.msra.mxu0 0.0
  %135 = vmatprep.subr.mxu0 0.0
  %136 = vmatpush1.msra.mxu0 0.0
  %137 = vmatprep.subr.mxu0 0.0
  %138 = vmatpush1.msra.mxu0 0.0
  %139 = vmatprep.subr.mxu0 0.0
  %140 = vmatpush1.msra.mxu0 0.0
  %141 = vmatprep.subr.mxu0 0.0
  %142 = vmatpush1.msra.mxu0 0.0
  %143 = vmatprep.subr.mxu0 0.0
  %144 = vmatpush1.msra.mxu0 0.0
  %145 = vmatprep.subr.mxu0 0.0
  %146 = vmatpush1.msra.mxu0 0.0
  %147 = vmatprep.subr.mxu0 0.0
  %148 = vmatpush1.msra.mxu0 0.0
  %149 = vmatprep.subr.mxu0 0.0
  %150 = vmatpush1.msra.mxu0 0.0
  %151 = vmatprep.subr.mxu0 0.0
  %152 = vmatpush1.msra.mxu0 0.0
  %153 = vmatprep.subr.mxu0 0.0
  %154 = vmatpush1.msra.mxu0 0.0
  %155 = vmatprep.subr.mxu0 0.0
  %156 = vmatpush1.msra.mxu0 0.0
  %157 = vmatprep.subr.mxu0 0.0
  %158 = vmatpush1.msra.mxu0 0.0
  %159 = vmatprep.subr.mxu0 0.0
  %160 = vmatpush1.msra.mxu0 0.0
  %161 = vmatprep.subr.mxu0 0.0
  %162 = vmatpush1.msra.mxu0 0.0
  %163 = vmatprep.subr.mxu0 0.0
  %164 = vmatpush1.msra.mxu0 0.0
  %165 = vmatprep.subr.mxu0 0.0
  %166 = vmatpush1.msra.mxu0 0.0
  %167 = vmatprep.subr.mxu0 0.0
  %168 = vmatpush1.msra.mxu0 0.0
  %169 = vmatprep.subr.mxu0 0.0
  %170 = vmatpush1.msra.mxu0 0.0
  %171 = vmatprep.subr.mxu0 0.0
  %172 = vmatpush1.msra.mxu0 0.0
  %173 = vmatprep.subr.mxu0 0.0
  %174 = vmatpush1.msra.mxu0 0.0
  %175 = vmatprep.subr.mxu0 0.0
  %176 = vmatpush1.msra.mxu0 0.0
  %177 = vmatprep.subr.mxu0 0.0
  %178 = vmatpush1.msra.mxu0 0.0
  %179 = vmatprep.subr.mxu0 0.0
  %180 = vmatpush1.msra.mxu0 0.0
  %181 = vmatprep.subr.mxu0 0.0
  %182 = vmatpush1.msra.mxu0 0.0
  %183 = vmatprep.subr.mxu0 0.0
  %184 = vmatpush1.msra.mxu0 0.0
  %185 = vmatprep.mubr.f32.mxu0 0.0
  %186 = vmatmul.mubr.f32.gmra.mrb[0].mxu0 %v98
  %v187 = vpop.f32.mrb[0].mxu0
  %v188 = vadd.f32 0.0, %v187
  %v189 = vpop.f32.mrb[0].mxu0
  %190 = vmatprep.mubr.f32.mxu0 0.0
  %191 = vmatmul.mubr.f32.gmra.mrb[0].mxu0 %v101
  %v192 = vpop.f32.mrb[0].mxu0
  %v193 = vadd.f32 0.0, %v192
  %v194 = vpop.f32.mrb[0].mxu0
  %195 = vmatprep.mubr.f32.mxu0 0.0
  %196 = vmatmul.mubr.f32.gmra.mrb[0].mxu0 %v104
  %v197 = vpop.f32.mrb[0].mxu0
  %v198 = vadd.f32 0.0, %v197
  %v199 = vpop.f32.mrb[0].mxu0
  %200 = vmatprep.mubr.f32.mxu0 0.0
  %201 = vmatmul.mubr.f32.gmra.mrb[0].mxu0 %v107
  %v202 = vpop.f32.mrb[0].mxu0
  %v203 = vadd.f32 0.0, %v202
  %v204 = vpop.f32.mrb[0].mxu0
  %205 = vmatprep.mubr.f32.mxu0 0.0
  %206 = vmatmul.mubr.f32.gmra.mrb[0].mxu0 %v110
  %v207 = vpop.f32.mrb[0].mxu0
  %v208 = vadd.f32 0.0, %v207
  %v209 = vpop.f32.mrb[0].mxu0
  %210 = vmatprep.mubr.f32.mxu0 0.0
  %211 = vmatmul.mubr.f32.gmra.mrb[0].mxu0 %v113
  %v212 = vpop.f32.mrb[0].mxu0
  %v213 = vadd.f32 0.0, %v212
  %v214 = vpop.f32.mrb[0].mxu0
  %215 = vmatprep.mubr.f32.mxu0 0.0
  %216 = vmatmul.mubr.f32.gmra.mrb[0].mxu0 %v116
  %v217 = vpop.f32.mrb[0].mxu0
  %v218 = vadd.f32 0.0, %v217
  %v219 = vpop.f32.mrb[0].mxu0
  %220 = vmatprep.mubr.f32.mxu0 0.0
  %221 = vmatmul.mubr.f32.gmra.mrb[0].mxu0 %v119
  %v222 = vpop.f32.mrb[0].mxu0
  %v223 = vadd.f32 0.0, %v222
  %v224 = vpop.f32.mrb[0].mxu0
  %225 = vdwg.mxu0
  %vm226 = vcmask 261120
  %v228 = vsel %vm226, 0.0, 0
  %230 = vmatprep.subr.mxu0 0.0
  %231 = vmatpush1.msra.mxu0 %v24
  %232 = vmatprep.subr.mxu0 0.0
  %233 = vmatpush1.msra.mxu0 %v25
  %234 = vmatprep.subr.mxu0 0.0
  %235 = vmatpush1.msra.mxu0 %v26
  %236 = vmatprep.subr.mxu0 0.0
  %237 = vmatpush1.msra.mxu0 %v27
  %238 = vmatprep.subr.mxu0 0.0
  %239 = vmatpush1.msra.mxu0 0.0
  %240 = vmatprep.subr.mxu0 0.0
  %241 = vmatpush1.msra.mxu0 0.0
  %242 = vmatprep.subr.mxu0 0.0
  %243 = vmatpush1.msra.mxu0 0.0
  %244 = vmatprep.subr.mxu0 0.0
  %245 = vmatpush1.msra.mxu0 0.0
  %246 = vmatprep.subr.mxu0 0.0
  %247 = vmatpush1.msra.mxu0 0.0
  %248 = vmatprep.subr.mxu0 0.0
  %249 = vmatpush1.msra.mxu0 0.0
  %250 = vmatprep.subr.mxu0 0.0
  %251 = vmatpush1.msra.mxu0 0.0
  %252 = vmatprep.subr.mxu0 0.0
  %253 = vmatpush1.msra.mxu0 0.0
  %254 = vmatprep.subr.mxu0 0.0
  %255 = vmatpush1.msra.mxu0 0.0
  %256 = vmatprep.subr.mxu0 0.0
  %257 = vmatpush1.msra.mxu0 0.0
  %258 = vmatprep.subr.mxu0 0.0
  %259 = vmatpush1.msra.mxu0 0.0
  %260 = vmatprep.subr.mxu0 0.0
  %261 = vmatpush1.msra.mxu0 0.0
  %262 = vmatprep.subr.mxu0 0.0
  %263 = vmatpush1.msra.mxu0 0.0
  %264 = vmatprep.subr.mxu0 0.0
  %265 = vmatpush1.msra.mxu0 0.0
  %266 = vmatprep.subr.mxu0 0.0
  %267 = vmatpush1.msra.mxu0 0.0
  %268 = vmatprep.subr.mxu0 0.0
  %269 = vmatpush1.msra.mxu0 0.0
  %270 = vmatprep.subr.mxu0 0.0
  %271 = vmatpush1.msra.mxu0 0.0
  %272 = vmatprep.subr.mxu0 0.0
  %273 = vmatpush1.msra.mxu0 0.0
  %274 = vmatprep.subr.mxu0 0.0
  %275 = vmatpush1.msra.mxu0 0.0
  %276 = vmatprep.subr.mxu0 0.0
  %277 = vmatpush1.msra.mxu0 0.0
  %278 = vmatprep.subr.mxu0 0.0
  %279 = vmatpush1.msra.mxu0 0.0
  %280 = vmatprep.subr.mxu0 0.0
  %281 = vmatpush1.msra.mxu0 0.0
  %282 = vmatprep.subr.mxu0 0.0
  %283 = vmatpush1.msra.mxu0 0.0
  %284 = vmatprep.subr.mxu0 0.0
  %285 = vmatpush1.msra.mxu0 0.0
  %286 = vmatprep.subr.mxu0 0.0
  %287 = vmatpush1.msra.mxu0 0.0
  %288 = vmatprep.subr.mxu0 0.0
  %289 = vmatpush1.msra.mxu0 0.0
  %290 = vmatprep.subr.mxu0 0.0
  %291 = vmatpush1.msra.mxu0 0.0
  %292 = vmatprep.subr.mxu0 0.0
  %293 = vmatpush1.msra.mxu0 0.0
  %294 = vmatprep.mubr.f32.mxu0 0.0
  %295 = vmatmul.mubr.f32.gmra.mrb[0].mxu0 %v228
  %v296 = vpop.f32.mrb[0].mxu0
  %v297 = vadd.f32 0.0, %v296
  %v298 = vpop.f32.mrb[0].mxu0
  %299 = vdwg.mxu0
  %v300 = vadd.f32 %v188, %v297
  %v301 = vxor.u32 %v300, 2147483648
  %v302 = vmul.f32 %v301, 1.442695
  %v303 = vpow.pop %v302
  %v304 = vadd.f32 %v303, 1.0
  %v305 = vrcp.pop %v304
  %v306 = vmul.f32 1.0, %v305
  %307 = vrot.lane.b32.xlu0 %v33, 64
  %v308 = vpop.permute.xlu0 %307
  %v310 = vadd.f32 %v297, %v308
  %312 = vrot.lane.b32.xlu0 %v310, 64
  %v313 = vpop.permute.xlu0 %312
  %v315 = vmul.f32 %v306, %v313
  %317 = vrot.lane.b32.xlu0 %v315, 64
  %v318 = vpop.permute.xlu0 %317
  %v320 = vadd.f32 %v188, %v318
  %v321 = vtanh.pop %v320
  %v322 = vsub.f32 1.0, %v306
  %324 = vrot.lane.b32.xlu0 %v321, 96
  %v325 = vpop.permute.xlu0 %324
  %v327 = vmul.f32 %v322, %v325
  %v328 = vmul.f32 %v306, 0.0
  %v329 = vadd.f32 %v327, %v328
  %vm330 = vcmp.gt.s32.totalorder %v37, 0
  %v331 = vsel %vm330, %v329, 0.0
  %333 = vrot.lane.b32.xlu0 %v331, 96
  %v334 = vpop.permute.xlu0 %333
  %v335 = vsel %vm226, %v334, 0
  %337 = vmatprep.subr.mxu0 0.0
  %338 = vmatpush1.msra.mxu0 %v24
  %339 = vmatprep.subr.mxu0 0.0
  %340 = vmatpush1.msra.mxu0 %v25
  %341 = vmatprep.subr.mxu0 0.0
  %342 = vmatpush1.msra.mxu0 %v26
  %343 = vmatprep.subr.mxu0 0.0
  %344 = vmatpush1.msra.mxu0 %v27
  %345 = vmatprep.subr.mxu0 0.0
  %346 = vmatpush1.msra.mxu0 0.0
  %347 = vmatprep.subr.mxu0 0.0
  %348 = vmatpush1.msra.mxu0 0.0
  %349 = vmatprep.subr.mxu0 0.0
  %350 = vmatpush1.msra.mxu0 0.0
  %351 = vmatprep.subr.mxu0 0.0
  %352 = vmatpush1.msra.mxu0 0.0
  %353 = vmatprep.subr.mxu0 0.0
  %354 = vmatpush1.msra.mxu0 0.0
  %355 = vmatprep.subr.mxu0 0.0
  %356 = vmatpush1.msra.mxu0 0.0
  %357 = vmatprep.subr.mxu0 0.0
  %358 = vmatpush1.msra.mxu0 0.0
  %359 = vmatprep.subr.mxu0 0.0
  %360 = vmatpush1.msra.mxu0 0.0
  %361 = vmatprep.subr.mxu0 0.0
  %362 = vmatpush1.msra.mxu0 0.0
  %363 = vmatprep.subr.mxu0 0.0
  %364 = vmatpush1.msra.mxu0 0.0
  %365 = vmatprep.subr.mxu0 0.0
  %366 = vmatpush1.msra.mxu0 0.0
  %367 = vmatprep.subr.mxu0 0.0
  %368 = vmatpush1.msra.mxu0 0.0
  %369 = vmatprep.subr.mxu0 0.0
  %370 = vmatpush1.msra.mxu0 0.0
  %371 = vmatprep.subr.mxu0 0.0
  %372 = vmatpush1.msra.mxu0 0.0
  %373 = vmatprep.subr.mxu0 0.0
  %374 = vmatpush1.msra.mxu0 0.0
  %375 = vmatprep.subr.mxu0 0.0
  %376 = vmatpush1.msra.mxu0 0.0
  %377 = vmatprep.subr.mxu0 0.0
  %378 = vmatpush1.msra.mxu0 0.0
  %379 = vmatprep.subr.mxu0 0.0
  %380 = vmatpush1.msra.mxu0 0.0
  %381 = vmatprep.subr.mxu0 0.0
  %382 = vmatpush1.msra.mxu0 0.0
  %383 = vmatprep.subr.mxu0 0.0
  %384 = vmatpush1.msra.mxu0 0.0
  %385 = vmatprep.subr.mxu0 0.0
  %386 = vmatpush1.msra.mxu0 0.0
  %387 = vmatprep.subr.mxu0 0.0
  %388 = vmatpush1.msra.mxu0 0.0
  %389 = vmatprep.subr.mxu0 0.0
  %390 = vmatpush1.msra.mxu0 0.0
  %391 = vmatprep.subr.mxu0 0.0
  %392 = vmatpush1.msra.mxu0 0.0
  %393 = vmatprep.subr.mxu0 0.0
  %394 = vmatpush1.msra.mxu0 0.0
  %395 = vmatprep.subr.mxu0 0.0
  %396 = vmatpush1.msra.mxu0 0.0
  %397 = vmatprep.subr.mxu0 0.0
  %398 = vmatpush1.msra.mxu0 0.0
  %399 = vmatprep.subr.mxu0 0.0
  %400 = vmatpush1.msra.mxu0 0.0
  %401 = vmatprep.mubr.f32.mxu0 0.0
  %402 = vmatmul.mubr.f32.gmra.mrb[0].mxu0 %v335
  %v403 = vpop.f32.mrb[0].mxu0
  %v404 = vadd.f32 0.0, %v403
  %v405 = vpop.f32.mrb[0].mxu0
  %406 = vdwg.mxu0
  %v407 = vadd.f32 %v193, %v404
  %v408 = vxor.u32 %v407, 2147483648
  %v409 = vmul.f32 %v408, 1.442695
  %v410 = vpow.pop %v409
  %v411 = vadd.f32 %v410, 1.0
  %v412 = vrcp.pop %v411
  %v413 = vmul.f32 1.0, %v412
  %v414 = vadd.f32 %v404, %v308
  %416 = vrot.lane.b32.xlu0 %v414, 64
  %v417 = vpop.permute.xlu0 %416
  %v419 = vmul.f32 %v413, %v417
  %421 = vrot.lane.b32.xlu0 %v419, 64
  %v422 = vpop.permute.xlu0 %421
  %v424 = vadd.f32 %v193, %v422
  %v425 = vtanh.pop %v424
  %v426 = vsub.f32 1.0, %v413
  %428 = vrot.lane.b32.xlu0 %v425, 96
  %v429 = vpop.permute.xlu0 %428
  %v431 = vmul.f32 %v426, %v429
  %v432 = vmul.f32 %v413, %v331
  %v433 = vadd.f32 %v431, %v432
  %vm434 = vcmp.gt.s32.totalorder %v37, 1
  %v435 = vsel %vm434, %v433, 0.0
  %v436 = vsel %vm434, %v433, %v331
  %438 = vrot.lane.b32.xlu0 %v436, 96
  %v439 = vpop.permute.xlu0 %438
  %v440 = vsel %vm226, %v439, 0
  %442 = vmatprep.subr.mxu0 0.0
  %443 = vmatpush1.msra.mxu0 %v24
  %444 = vmatprep.subr.mxu0 0.0
  %445 = vmatpush1.msra.mxu0 %v25
  %446 = vmatprep.subr.mxu0 0.0
  %447 = vmatpush1.msra.mxu0 %v26
  %448 = vmatprep.subr.mxu0 0.0
  %449 = vmatpush1.msra.mxu0 %v27
  %450 = vmatprep.subr.mxu0 0.0
  %451 = vmatpush1.msra.mxu0 0.0
  %452 = vmatprep.subr.mxu0 0.0
  %453 = vmatpush1.msra.mxu0 0.0
  %454 = vmatprep.subr.mxu0 0.0
  %455 = vmatpush1.msra.mxu0 0.0
  %456 = vmatprep.subr.mxu0 0.0
  %457 = vmatpush1.msra.mxu0 0.0
  %458 = vmatprep.subr.mxu0 0.0
  %459 = vmatpush1.msra.mxu0 0.0
  %460 = vmatprep.subr.mxu0 0.0
  %461 = vmatpush1.msra.mxu0 0.0
  %462 = vmatprep.subr.mxu0 0.0
  %463 = vmatpush1.msra.mxu0 0.0
  %464 = vmatprep.subr.mxu0 0.0
  %465 = vmatpush1.msra.mxu0 0.0
  %466 = vmatprep.subr.mxu0 0.0
  %467 = vmatpush1.msra.mxu0 0.0
  %468 = vmatprep.subr.mxu0 0.0
  %469 = vmatpush1.msra.mxu0 0.0
  %470 = vmatprep.subr.mxu0 0.0
  %471 = vmatpush1.msra.mxu0 0.0
  %472 = vmatprep.subr.mxu0 0.0
  %473 = vmatpush1.msra.mxu0 0.0
  %474 = vmatprep.subr.mxu0 0.0
  %475 = vmatpush1.msra.mxu0 0.0
  %476 = vmatprep.subr.mxu0 0.0
  %477 = vmatpush1.msra.mxu0 0.0
  %478 = vmatprep.subr.mxu0 0.0
  %479 = vmatpush1.msra.mxu0 0.0
  %480 = vmatprep.subr.mxu0 0.0
  %481 = vmatpush1.msra.mxu0 0.0
  %482 = vmatprep.subr.mxu0 0.0
  %483 = vmatpush1.msra.mxu0 0.0
  %484 = vmatprep.subr.mxu0 0.0
  %485 = vmatpush1.msra.mxu0 0.0
  %486 = vmatprep.subr.mxu0 0.0
  %487 = vmatpush1.msra.mxu0 0.0
  %488 = vmatprep.subr.mxu0 0.0
  %489 = vmatpush1.msra.mxu0 0.0
  %490 = vmatprep.subr.mxu0 0.0
  %491 = vmatpush1.msra.mxu0 0.0
  %492 = vmatprep.subr.mxu0 0.0
  %493 = vmatpush1.msra.mxu0 0.0
  %494 = vmatprep.subr.mxu0 0.0
  %495 = vmatpush1.msra.mxu0 0.0
  %496 = vmatprep.subr.mxu0 0.0
  %497 = vmatpush1.msra.mxu0 0.0
  %498 = vmatprep.subr.mxu0 0.0
  %499 = vmatpush1.msra.mxu0 0.0
  %500 = vmatprep.subr.mxu0 0.0
  %501 = vmatpush1.msra.mxu0 0.0
  %502 = vmatprep.subr.mxu0 0.0
  %503 = vmatpush1.msra.mxu0 0.0
  %504 = vmatprep.subr.mxu0 0.0
  %505 = vmatpush1.msra.mxu0 0.0
  %506 = vmatprep.mubr.f32.mxu0 0.0
  %507 = vmatmul.mubr.f32.gmra.mrb[0].mxu0 %v440
  %v508 = vpop.f32.mrb[0].mxu0
  %v509 = vadd.f32 0.0, %v508
  %v510 = vpop.f32.mrb[0].mxu0
  %511 = vdwg.mxu0
  %v512 = vadd.f32 %v198, %v509
  %v513 = vxor.u32 %v512, 2147483648
  %v514 = vmul.f32 %v513, 1.442695
  %v515 = vpow.pop %v514
  %v516 = vadd.f32 %v515, 1.0
  %v517 = vrcp.pop %v516
  %v518 = vmul.f32 1.0, %v517
  %v519 = vadd.f32 %v509, %v308
  %521 = vrot.lane.b32.xlu0 %v519, 64
  %v522 = vpop.permute.xlu0 %521
  %v524 = vmul.f32 %v518, %v522
  %526 = vrot.lane.b32.xlu0 %v524, 64
  %v527 = vpop.permute.xlu0 %526
  %v529 = vadd.f32 %v198, %v527
  %v530 = vtanh.pop %v529
  %v531 = vsub.f32 1.0, %v518
  %533 = vrot.lane.b32.xlu0 %v530, 96
  %v534 = vpop.permute.xlu0 %533
  %v536 = vmul.f32 %v531, %v534
  %v537 = vmul.f32 %v518, %v436
  %v538 = vadd.f32 %v536, %v537
  %vm539 = vcmp.gt.s32.totalorder %v37, 2
  %v540 = vsel %vm539, %v538, 0.0
  %v541 = vsel %vm539, %v538, %v436
  %543 = vrot.lane.b32.xlu0 %v541, 96
  %v544 = vpop.permute.xlu0 %543
  %v545 = vsel %vm226, %v544, 0
  %547 = vmatprep.subr.mxu0 0.0
  %548 = vmatpush1.msra.mxu0 %v24
  %549 = vmatprep.subr.mxu0 0.0
  %550 = vmatpush1.msra.mxu0 %v25
  %551 = vmatprep.subr.mxu0 0.0
  %552 = vmatpush1.msra.mxu0 %v26
  %553 = vmatprep.subr.mxu0 0.0
  %554 = vmatpush1.msra.mxu0 %v27
  %555 = vmatprep.subr.mxu0 0.0
  %556 = vmatpush1.msra.mxu0 0.0
  %557 = vmatprep.subr.mxu0 0.0
  %558 = vmatpush1.msra.mxu0 0.0
  %559 = vmatprep.subr.mxu0 0.0
  %560 = vmatpush1.msra.mxu0 0.0
  %561 = vmatprep.subr.mxu0 0.0
  %562 = vmatpush1.msra.mxu0 0.0
  %563 = vmatprep.subr.mxu0 0.0
  %564 = vmatpush1.msra.mxu0 0.0
  %565 = vmatprep.subr.mxu0 0.0
  %566 = vmatpush1.msra.mxu0 0.0
  %567 = vmatprep.subr.mxu0 0.0
  %568 = vmatpush1.msra.mxu0 0.0
  %569 = vmatprep.subr.mxu0 0.0
  %570 = vmatpush1.msra.mxu0 0.0
  %571 = vmatprep.subr.mxu0 0.0
  %572 = vmatpush1.msra.mxu0 0.0
  %573 = vmatprep.subr.mxu0 0.0
  %574 = vmatpush1.msra.mxu0 0.0
  %575 = vmatprep.subr.mxu0 0.0
  %576 = vmatpush1.msra.mxu0 0.0
  %577 = vmatprep.subr.mxu0 0.0
  %578 = vmatpush1.msra.mxu0 0.0
  %579 = vmatprep.subr.mxu0 0.0
  %580 = vmatpush1.msra.mxu0 0.0
  %581 = vmatprep.subr.mxu0 0.0
  %582 = vmatpush1.msra.mxu0 0.0
  %583 = vmatprep.subr.mxu0 0.0
  %584 = vmatpush1.msra.mxu0 0.0
  %585 = vmatprep.subr.mxu0 0.0
  %586 = vmatpush1.msra.mxu0 0.0
  %587 = vmatprep.subr.mxu0 0.0
  %588 = vmatpush1.msra.mxu0 0.0
  %589 = vmatprep.subr.mxu0 0.0
  %590 = vmatpush1.msra.mxu0 0.0
  %591 = vmatprep.subr.mxu0 0.0
  %592 = vmatpush1.msra.mxu0 0.0
  %593 = vmatprep.subr.mxu0 0.0
  %594 = vmatpush1.msra.mxu0 0.0
  %595 = vmatprep.subr.mxu0 0.0
  %596 = vmatpush1.msra.mxu0 0.0
  %597 = vmatprep.subr.mxu0 0.0
  %598 = vmatpush1.msra.mxu0 0.0
  %599 = vmatprep.subr.mxu0 0.0
  %600 = vmatpush1.msra.mxu0 0.0
  %601 = vmatprep.subr.mxu0 0.0
  %602 = vmatpush1.msra.mxu0 0.0
  %603 = vmatprep.subr.mxu0 0.0
  %604 = vmatpush1.msra.mxu0 0.0
  %605 = vmatprep.subr.mxu0 0.0
  %606 = vmatpush1.msra.mxu0 0.0
  %607 = vmatprep.subr.mxu0 0.0
  %608 = vmatpush1.msra.mxu0 0.0
  %609 = vmatprep.subr.mxu0 0.0
  %610 = vmatpush1.msra.mxu0 0.0
  %611 = vmatprep.mubr.f32.mxu0 0.0
  %612 = vmatmul.mubr.f32.gmra.mrb[0].mxu0 %v545
  %v613 = vpop.f32.mrb[0].mxu0
  %v614 = vadd.f32 0.0, %v613
  %v615 = vpop.f32.mrb[0].mxu0
  %616 = vdwg.mxu0
  %v617 = vadd.f32 %v203, %v614
  %v618 = vxor.u32 %v617, 2147483648
  %v619 = vmul.f32 %v618, 1.442695
  %v620 = vpow.pop %v619
  %v621 = vadd.f32 %v620, 1.0
  %v622 = vrcp.pop %v621
  %v623 = vmul.f32 1.0, %v622
  %v624 = vadd.f32 %v614, %v308
  %626 = vrot.lane.b32.xlu0 %v624, 64
  %v627 = vpop.permute.xlu0 %626
  %v629 = vmul.f32 %v623, %v627
  %631 = vrot.lane.b32.xlu0 %v629, 64
  %v632 = vpop.permute.xlu0 %631
  %v634 = vadd.f32 %v203, %v632
  %v635 = vtanh.pop %v634
  %v636 = vsub.f32 1.0, %v623
  %638 = vrot.lane.b32.xlu0 %v635, 96
  %v639 = vpop.permute.xlu0 %638
  %v641 = vmul.f32 %v636, %v639
  %v642 = vmul.f32 %v623, %v541
  %v643 = vadd.f32 %v641, %v642
  %vm644 = vcmp.gt.s32.totalorder %v37, 3
  %v645 = vsel %vm644, %v643, 0.0
  %v646 = vsel %vm644, %v643, %v541
  %648 = vrot.lane.b32.xlu0 %v646, 96
  %v649 = vpop.permute.xlu0 %648
  %v650 = vsel %vm226, %v649, 0
  %652 = vmatprep.subr.mxu0 0.0
  %653 = vmatpush1.msra.mxu0 %v24
  %654 = vmatprep.subr.mxu0 0.0
  %655 = vmatpush1.msra.mxu0 %v25
  %656 = vmatprep.subr.mxu0 0.0
  %657 = vmatpush1.msra.mxu0 %v26
  %658 = vmatprep.subr.mxu0 0.0
  %659 = vmatpush1.msra.mxu0 %v27
  %660 = vmatprep.subr.mxu0 0.0
  %661 = vmatpush1.msra.mxu0 0.0
  %662 = vmatprep.subr.mxu0 0.0
  %663 = vmatpush1.msra.mxu0 0.0
  %664 = vmatprep.subr.mxu0 0.0
  %665 = vmatpush1.msra.mxu0 0.0
  %666 = vmatprep.subr.mxu0 0.0
  %667 = vmatpush1.msra.mxu0 0.0
  %668 = vmatprep.subr.mxu0 0.0
  %669 = vmatpush1.msra.mxu0 0.0
  %670 = vmatprep.subr.mxu0 0.0
  %671 = vmatpush1.msra.mxu0 0.0
  %672 = vmatprep.subr.mxu0 0.0
  %673 = vmatpush1.msra.mxu0 0.0
  %674 = vmatprep.subr.mxu0 0.0
  %675 = vmatpush1.msra.mxu0 0.0
  %676 = vmatprep.subr.mxu0 0.0
  %677 = vmatpush1.msra.mxu0 0.0
  %678 = vmatprep.subr.mxu0 0.0
  %679 = vmatpush1.msra.mxu0 0.0
  %680 = vmatprep.subr.mxu0 0.0
  %681 = vmatpush1.msra.mxu0 0.0
  %682 = vmatprep.subr.mxu0 0.0
  %683 = vmatpush1.msra.mxu0 0.0
  %684 = vmatprep.subr.mxu0 0.0
  %685 = vmatpush1.msra.mxu0 0.0
  %686 = vmatprep.subr.mxu0 0.0
  %687 = vmatpush1.msra.mxu0 0.0
  %688 = vmatprep.subr.mxu0 0.0
  %689 = vmatpush1.msra.mxu0 0.0
  %690 = vmatprep.subr.mxu0 0.0
  %691 = vmatpush1.msra.mxu0 0.0
  %692 = vmatprep.subr.mxu0 0.0
  %693 = vmatpush1.msra.mxu0 0.0
  %694 = vmatprep.subr.mxu0 0.0
  %695 = vmatpush1.msra.mxu0 0.0
  %696 = vmatprep.subr.mxu0 0.0
  %697 = vmatpush1.msra.mxu0 0.0
  %698 = vmatprep.subr.mxu0 0.0
  %699 = vmatpush1.msra.mxu0 0.0
  %700 = vmatprep.subr.mxu0 0.0
  %701 = vmatpush1.msra.mxu0 0.0
  %702 = vmatprep.subr.mxu0 0.0
  %703 = vmatpush1.msra.mxu0 0.0
  %704 = vmatprep.subr.mxu0 0.0
  %705 = vmatpush1.msra.mxu0 0.0
  %706 = vmatprep.subr.mxu0 0.0
  %707 = vmatpush1.msra.mxu0 0.0
  %708 = vmatprep.subr.mxu0 0.0
  %709 = vmatpush1.msra.mxu0 0.0
  %710 = vmatprep.subr.mxu0 0.0
  %711 = vmatpush1.msra.mxu0 0.0
  %712 = vmatprep.subr.mxu0 0.0
  %713 = vmatpush1.msra.mxu0 0.0
  %714 = vmatprep.subr.mxu0 0.0
  %715 = vmatpush1.msra.mxu0 0.0
  %716 = vmatprep.mubr.f32.mxu0 0.0
  %717 = vmatmul.mubr.f32.gmra.mrb[0].mxu0 %v650
  %v718 = vpop.f32.mrb[0].mxu0
  %v719 = vadd.f32 0.0, %v718
  %v720 = vpop.f32.mrb[0].mxu0
  %721 = vdwg.mxu0
  %v722 = vadd.f32 %v208, %v719
  %v723 = vxor.u32 %v722, 2147483648
  %v724 = vmul.f32 %v723, 1.442695
  %v725 = vpow.pop %v724
  %v726 = vadd.f32 %v725, 1.0
  %v727 = vrcp.pop %v726
  %v728 = vmul.f32 1.0, %v727
  %v729 = vadd.f32 %v719, %v308
  %731 = vrot.lane.b32.xlu0 %v729, 64
  %v732 = vpop.permute.xlu0 %731
  %v734 = vmul.f32 %v728, %v732
  %736 = vrot.lane.b32.xlu0 %v734, 64
  %v737 = vpop.permute.xlu0 %736
  %v739 = vadd.f32 %v208, %v737
  %v740 = vtanh.pop %v739
  %v741 = vsub.f32 1.0, %v728
  %743 = vrot.lane.b32.xlu0 %v740, 96
  %v744 = vpop.permute.xlu0 %743
  %v746 = vmul.f32 %v741, %v744
  %v747 = vmul.f32 %v728, %v646
  %v748 = vadd.f32 %v746, %v747
  %vm749 = vcmp.gt.s32.totalorder %v37, 4
  %v750 = vsel %vm749, %v748, 0.0
  %v751 = vsel %vm749, %v748, %v646
  %753 = vrot.lane.b32.xlu0 %v751, 96
  %v754 = vpop.permute.xlu0 %753
  %v755 = vsel %vm226, %v754, 0
  %757 = vmatprep.subr.mxu0 0.0
  %758 = vmatpush1.msra.mxu0 %v24
  %759 = vmatprep.subr.mxu0 0.0
  %760 = vmatpush1.msra.mxu0 %v25
  %761 = vmatprep.subr.mxu0 0.0
  %762 = vmatpush1.msra.mxu0 %v26
  %763 = vmatprep.subr.mxu0 0.0
  %764 = vmatpush1.msra.mxu0 %v27
  %765 = vmatprep.subr.mxu0 0.0
  %766 = vmatpush1.msra.mxu0 0.0
  %767 = vmatprep.subr.mxu0 0.0
  %768 = vmatpush1.msra.mxu0 0.0
  %769 = vmatprep.subr.mxu0 0.0
  %770 = vmatpush1.msra.mxu0 0.0
  %771 = vmatprep.subr.mxu0 0.0
  %772 = vmatpush1.msra.mxu0 0.0
  %773 = vmatprep.subr.mxu0 0.0
  %774 = vmatpush1.msra.mxu0 0.0
  %775 = vmatprep.subr.mxu0 0.0
  %776 = vmatpush1.msra.mxu0 0.0
  %777 = vmatprep.subr.mxu0 0.0
  %778 = vmatpush1.msra.mxu0 0.0
  %779 = vmatprep.subr.mxu0 0.0
  %780 = vmatpush1.msra.mxu0 0.0
  %781 = vmatprep.subr.mxu0 0.0
  %782 = vmatpush1.msra.mxu0 0.0
  %783 = vmatprep.subr.mxu0 0.0
  %784 = vmatpush1.msra.mxu0 0.0
  %785 = vmatprep.subr.mxu0 0.0
  %786 = vmatpush1.msra.mxu0 0.0
  %787 = vmatprep.subr.mxu0 0.0
  %788 = vmatpush1.msra.mxu0 0.0
  %789 = vmatprep.subr.mxu0 0.0
  %790 = vmatpush1.msra.mxu0 0.0
  %791 = vmatprep.subr.mxu0 0.0
  %792 = vmatpush1.msra.mxu0 0.0
  %793 = vmatprep.subr.mxu0 0.0
  %794 = vmatpush1.msra.mxu0 0.0
  %795 = vmatprep.subr.mxu0 0.0
  %796 = vmatpush1.msra.mxu0 0.0
  %797 = vmatprep.subr.mxu0 0.0
  %798 = vmatpush1.msra.mxu0 0.0
  %799 = vmatprep.subr.mxu0 0.0
  %800 = vmatpush1.msra.mxu0 0.0
  %801 = vmatprep.subr.mxu0 0.0
  %802 = vmatpush1.msra.mxu0 0.0
  %803 = vmatprep.subr.mxu0 0.0
  %804 = vmatpush1.msra.mxu0 0.0
  %805 = vmatprep.subr.mxu0 0.0
  %806 = vmatpush1.msra.mxu0 0.0
  %807 = vmatprep.subr.mxu0 0.0
  %808 = vmatpush1.msra.mxu0 0.0
  %809 = vmatprep.subr.mxu0 0.0
  %810 = vmatpush1.msra.mxu0 0.0
  %811 = vmatprep.subr.mxu0 0.0
  %812 = vmatpush1.msra.mxu0 0.0
  %813 = vmatprep.subr.mxu0 0.0
  %814 = vmatpush1.msra.mxu0 0.0
  %815 = vmatprep.subr.mxu0 0.0
  %816 = vmatpush1.msra.mxu0 0.0
  %817 = vmatprep.subr.mxu0 0.0
  %818 = vmatpush1.msra.mxu0 0.0
  %819 = vmatprep.subr.mxu0 0.0
  %820 = vmatpush1.msra.mxu0 0.0
  %821 = vmatprep.mubr.f32.mxu0 0.0
  %822 = vmatmul.mubr.f32.gmra.mrb[0].mxu0 %v755
  %v823 = vpop.f32.mrb[0].mxu0
  %v824 = vadd.f32 0.0, %v823
  %v825 = vpop.f32.mrb[0].mxu0
  %826 = vdwg.mxu0
  %v827 = vadd.f32 %v213, %v824
  %v828 = vxor.u32 %v827, 2147483648
  %v829 = vmul.f32 %v828, 1.442695
  %v830 = vpow.pop %v829
  %v831 = vadd.f32 %v830, 1.0
  %v832 = vrcp.pop %v831
  %v833 = vmul.f32 1.0, %v832
  %v834 = vadd.f32 %v824, %v308
  %836 = vrot.lane.b32.xlu0 %v834, 64
  %v837 = vpop.permute.xlu0 %836
  %v839 = vmul.f32 %v833, %v837
  %841 = vrot.lane.b32.xlu0 %v839, 64
  %v842 = vpop.permute.xlu0 %841
  %v844 = vadd.f32 %v213, %v842
  %v845 = vtanh.pop %v844
  %v846 = vsub.f32 1.0, %v833
  %848 = vrot.lane.b32.xlu0 %v845, 96
  %v849 = vpop.permute.xlu0 %848
  %v851 = vmul.f32 %v846, %v849
  %v852 = vmul.f32 %v833, %v751
  %v853 = vadd.f32 %v851, %v852
  %vm854 = vcmp.gt.s32.totalorder %v37, 5
  %v855 = vsel %vm854, %v853, 0.0
  %v856 = vsel %vm854, %v853, %v751
  %858 = vrot.lane.b32.xlu0 %v856, 96
  %v859 = vpop.permute.xlu0 %858
  %v860 = vsel %vm226, %v859, 0
  %862 = vmatprep.subr.mxu0 0.0
  %863 = vmatpush1.msra.mxu0 %v24
  %864 = vmatprep.subr.mxu0 0.0
  %865 = vmatpush1.msra.mxu0 %v25
  %866 = vmatprep.subr.mxu0 0.0
  %867 = vmatpush1.msra.mxu0 %v26
  %868 = vmatprep.subr.mxu0 0.0
  %869 = vmatpush1.msra.mxu0 %v27
  %870 = vmatprep.subr.mxu0 0.0
  %871 = vmatpush1.msra.mxu0 0.0
  %872 = vmatprep.subr.mxu0 0.0
  %873 = vmatpush1.msra.mxu0 0.0
  %874 = vmatprep.subr.mxu0 0.0
  %875 = vmatpush1.msra.mxu0 0.0
  %876 = vmatprep.subr.mxu0 0.0
  %877 = vmatpush1.msra.mxu0 0.0
  %878 = vmatprep.subr.mxu0 0.0
  %879 = vmatpush1.msra.mxu0 0.0
  %880 = vmatprep.subr.mxu0 0.0
  %881 = vmatpush1.msra.mxu0 0.0
  %882 = vmatprep.subr.mxu0 0.0
  %883 = vmatpush1.msra.mxu0 0.0
  %884 = vmatprep.subr.mxu0 0.0
  %885 = vmatpush1.msra.mxu0 0.0
  %886 = vmatprep.subr.mxu0 0.0
  %887 = vmatpush1.msra.mxu0 0.0
  %888 = vmatprep.subr.mxu0 0.0
  %889 = vmatpush1.msra.mxu0 0.0
  %890 = vmatprep.subr.mxu0 0.0
  %891 = vmatpush1.msra.mxu0 0.0
  %892 = vmatprep.subr.mxu0 0.0
  %893 = vmatpush1.msra.mxu0 0.0
  %894 = vmatprep.subr.mxu0 0.0
  %895 = vmatpush1.msra.mxu0 0.0
  %896 = vmatprep.subr.mxu0 0.0
  %897 = vmatpush1.msra.mxu0 0.0
  %898 = vmatprep.subr.mxu0 0.0
  %899 = vmatpush1.msra.mxu0 0.0
  %900 = vmatprep.subr.mxu0 0.0
  %901 = vmatpush1.msra.mxu0 0.0
  %902 = vmatprep.subr.mxu0 0.0
  %903 = vmatpush1.msra.mxu0 0.0
  %904 = vmatprep.subr.mxu0 0.0
  %905 = vmatpush1.msra.mxu0 0.0
  %906 = vmatprep.subr.mxu0 0.0
  %907 = vmatpush1.msra.mxu0 0.0
  %908 = vmatprep.subr.mxu0 0.0
  %909 = vmatpush1.msra.mxu0 0.0
  %910 = vmatprep.subr.mxu0 0.0
  %911 = vmatpush1.msra.mxu0 0.0
  %912 = vmatprep.subr.mxu0 0.0
  %913 = vmatpush1.msra.mxu0 0.0
  %914 = vmatprep.subr.mxu0 0.0
  %915 = vmatpush1.msra.mxu0 0.0
  %916 = vmatprep.subr.mxu0 0.0
  %917 = vmatpush1.msra.mxu0 0.0
  %918 = vmatprep.subr.mxu0 0.0
  %919 = vmatpush1.msra.mxu0 0.0
  %920 = vmatprep.subr.mxu0 0.0
  %921 = vmatpush1.msra.mxu0 0.0
  %922 = vmatprep.subr.mxu0 0.0
  %923 = vmatpush1.msra.mxu0 0.0
  %924 = vmatprep.subr.mxu0 0.0
  %925 = vmatpush1.msra.mxu0 0.0
  %926 = vmatprep.mubr.f32.mxu0 0.0
  %927 = vmatmul.mubr.f32.gmra.mrb[0].mxu0 %v860
  %v928 = vpop.f32.mrb[0].mxu0
  %v929 = vadd.f32 0.0, %v928
  %v930 = vpop.f32.mrb[0].mxu0
  %931 = vdwg.mxu0
  %v932 = vadd.f32 %v218, %v929
  %v933 = vxor.u32 %v932, 2147483648
  %v934 = vmul.f32 %v933, 1.442695
  %v935 = vpow.pop %v934
  %v936 = vadd.f32 %v935, 1.0
  %v937 = vrcp.pop %v936
  %v938 = vmul.f32 1.0, %v937
  %v939 = vadd.f32 %v929, %v308
  %941 = vrot.lane.b32.xlu0 %v939, 64
  %v942 = vpop.permute.xlu0 %941
  %v944 = vmul.f32 %v938, %v942
  %946 = vrot.lane.b32.xlu0 %v944, 64
  %v947 = vpop.permute.xlu0 %946
  %v949 = vadd.f32 %v218, %v947
  %v950 = vtanh.pop %v949
  %v951 = vsub.f32 1.0, %v938
  %953 = vrot.lane.b32.xlu0 %v950, 96
  %v954 = vpop.permute.xlu0 %953
  %v956 = vmul.f32 %v951, %v954
  %v957 = vmul.f32 %v938, %v856
  %v958 = vadd.f32 %v956, %v957
  %vm959 = vcmp.gt.s32.totalorder %v37, 6
  %v960 = vsel %vm959, %v958, 0.0
  %v961 = vsel %vm959, %v958, %v856
  %963 = vrot.lane.b32.xlu0 %v961, 96
  %v964 = vpop.permute.xlu0 %963
  %v965 = vsel %vm226, %v964, 0
  %967 = vmatprep.subr.mxu0 0.0
  %968 = vmatpush1.msra.mxu0 %v24
  %969 = vmatprep.subr.mxu0 0.0
  %970 = vmatpush1.msra.mxu0 %v25
  %971 = vmatprep.subr.mxu0 0.0
  %972 = vmatpush1.msra.mxu0 %v26
  %973 = vmatprep.subr.mxu0 0.0
  %974 = vmatpush1.msra.mxu0 %v27
  %975 = vmatprep.subr.mxu0 0.0
  %976 = vmatpush1.msra.mxu0 0.0
  %977 = vmatprep.subr.mxu0 0.0
  %978 = vmatpush1.msra.mxu0 0.0
  %979 = vmatprep.subr.mxu0 0.0
  %980 = vmatpush1.msra.mxu0 0.0
  %981 = vmatprep.subr.mxu0 0.0
  %982 = vmatpush1.msra.mxu0 0.0
  %983 = vmatprep.subr.mxu0 0.0
  %984 = vmatpush1.msra.mxu0 0.0
  %985 = vmatprep.subr.mxu0 0.0
  %986 = vmatpush1.msra.mxu0 0.0
  %987 = vmatprep.subr.mxu0 0.0
  %988 = vmatpush1.msra.mxu0 0.0
  %989 = vmatprep.subr.mxu0 0.0
  %990 = vmatpush1.msra.mxu0 0.0
  %991 = vmatprep.subr.mxu0 0.0
  %992 = vmatpush1.msra.mxu0 0.0
  %993 = vmatprep.subr.mxu0 0.0
  %994 = vmatpush1.msra.mxu0 0.0
  %995 = vmatprep.subr.mxu0 0.0
  %996 = vmatpush1.msra.mxu0 0.0
  %997 = vmatprep.subr.mxu0 0.0
  %998 = vmatpush1.msra.mxu0 0.0
  %999 = vmatprep.subr.mxu0 0.0
  %1000 = vmatpush1.msra.mxu0 0.0
  %1001 = vmatprep.subr.mxu0 0.0
  %1002 = vmatpush1.msra.mxu0 0.0
  %1003 = vmatprep.subr.mxu0 0.0
  %1004 = vmatpush1.msra.mxu0 0.0
  %1005 = vmatprep.subr.mxu0 0.0
  %1006 = vmatpush1.msra.mxu0 0.0
  %1007 = vmatprep.subr.mxu0 0.0
  %1008 = vmatpush1.msra.mxu0 0.0
  %1009 = vmatprep.subr.mxu0 0.0
  %1010 = vmatpush1.msra.mxu0 0.0
  %1011 = vmatprep.subr.mxu0 0.0
  %1012 = vmatpush1.msra.mxu0 0.0
  %1013 = vmatprep.subr.mxu0 0.0
  %1014 = vmatpush1.msra.mxu0 0.0
  %1015 = vmatprep.subr.mxu0 0.0
  %1016 = vmatpush1.msra.mxu0 0.0
  %1017 = vmatprep.subr.mxu0 0.0
  %1018 = vmatpush1.msra.mxu0 0.0
  %1019 = vmatprep.subr.mxu0 0.0
  %1020 = vmatpush1.msra.mxu0 0.0
  %1021 = vmatprep.subr.mxu0 0.0
  %1022 = vmatpush1.msra.mxu0 0.0
  %1023 = vmatprep.subr.mxu0 0.0
  %1024 = vmatpush1.msra.mxu0 0.0
  %1025 = vmatprep.subr.mxu0 0.0
  %1026 = vmatpush1.msra.mxu0 0.0
  %1027 = vmatprep.subr.mxu0 0.0
  %1028 = vmatpush1.msra.mxu0 0.0
  %1029 = vmatprep.subr.mxu0 0.0
  %1030 = vmatpush1.msra.mxu0 0.0
  %1031 = vmatprep.mubr.f32.mxu0 0.0
  %1032 = vmatmul.mubr.f32.gmra.mrb[0].mxu0 %v965
  %v1033 = vpop.f32.mrb[0].mxu0
  %v1034 = vadd.f32 0.0, %v1033
  %v1035 = vpop.f32.mrb[0].mxu0
  %1036 = vdwg.mxu0
  %v1037 = vadd.f32 %v223, %v1034
  %v1038 = vxor.u32 %v1037, 2147483648
  %v1039 = vmul.f32 %v1038, 1.442695
  %v1040 = vpow.pop %v1039
  %v1041 = vadd.f32 %v1040, 1.0
  %v1042 = vrcp.pop %v1041
  %v1043 = vmul.f32 1.0, %v1042
  %v1044 = vadd.f32 %v1034, %v308
  %1046 = vrot.lane.b32.xlu0 %v1044, 64
  %v1047 = vpop.permute.xlu0 %1046
  %v1049 = vmul.f32 %v1043, %v1047
  %1051 = vrot.lane.b32.xlu0 %v1049, 64
  %v1052 = vpop.permute.xlu0 %1051
  %v1054 = vadd.f32 %v223, %v1052
  %v1055 = vtanh.pop %v1054
  %v1056 = vsub.f32 1.0, %v1043
  %1058 = vrot.lane.b32.xlu0 %v1055, 96
  %v1059 = vpop.permute.xlu0 %1058
  %v1061 = vmul.f32 %v1056, %v1059
  %v1062 = vmul.f32 %v1043, %v961
  %v1063 = vadd.f32 %v1061, %v1062
  %vm1064 = vcmp.gt.s32.totalorder %v37, 7
  %v1065 = vsel %vm1064, %v1063, 0.0
  %v1066 = vsel %vm1064, %v1063, %v961
  %1069 = vrot.lane.b32.xlu0 %v540, 32
  %v1070 = vpop.permute.xlu0 %1069
  %1073 = vrot.lane.b32.xlu0 %v645, 64
  %v1074 = vpop.permute.xlu0 %1073
  %1077 = vrot.lane.b32.xlu0 %v750, 96
  %v1078 = vpop.permute.xlu0 %1077
  %1081 = vrot.lane.b32.xlu0 %v960, 32
  %v1082 = vpop.permute.xlu0 %1081
  %1085 = vrot.lane.b32.xlu0 %v1065, 64
  %v1086 = vpop.permute.xlu0 %1085
  %v1088 = vsel %vm226, %v334, %v435
  %vm1089 = vcmask 523264
  %v1090 = vsel %vm1089, %v1088, %v1070
  %vm1091 = vcmask 785408
  %v1092 = vsel %vm1091, %v1090, %v1074
  %v1093 = vsel %vm226, %v1078, %v855
  %v1094 = vsel %vm1089, %v1093, %v1082
  %v1095 = vsel %vm1091, %v1094, %v1086
  %1096 = vst [vmem:[%s5] sm:$0xff] %v1092
  %1097 = vst [vmem:[%s5 + $0x8] sm:$0xff] %v1095
  %1099 = vrot.lane.b32.xlu0 %v1066, 96
  %v1100 = vpop.permute.xlu0 %1099
  %1102 = vst.msk [vmem:[%s6] sm:$0xff] %vm226, %v1100
  // Predicated region
  $region22: #{encoder_forward.1} parent=0 // pred_check
    _
  $region23: #{encoder_forward.1} parent=0 // pred_check_branch
    %1104 = sbr.rel (0) target = $region25
  $region24: #{encoder_forward.1} parent=0 // pred_region
    _
  $region25: #{encoder_forward.1} parent=0 // pred_fallthru
    _
  // Predicated region
  $region26: #{encoder_forward.1} parent=0 // pred_check
    _
  $region27: #{encoder_forward.1} parent=0 // pred_check_branch
    %1106 = sbr.rel (0) target = $region29
  $region28: #{encoder_forward.1} parent=0 // pred_region
    _
  $region29: #{encoder_forward.1} parent=0 // pred_fallthru
    _
  // Predicated region
  $region30: #{encoder_forward.1} parent=0 // pred_check
    _
  $region31: #{encoder_forward.1} parent=0 // pred_check_branch
    %1108 = sbr.rel (0) target = $region33
  $region32: #{encoder_forward.1} parent=0 // pred_region
    _
  $region33: #{encoder_forward.1} parent=0 // pred_fallthru
    _
  // Predicated region
  $region34: #{encoder_forward.1} parent=0 // pred_check
    _
  $region35: #{encoder_forward.1} parent=0 // pred_check_branch
    %1110 = sbr.rel (0) target = $region37
  $region36: #{encoder_forward.1} parent=0 // pred_region
    _
  $region37: #{encoder_forward.1} parent=0 // pred_fallthru
    _

</llo_original>
